<compile_context>
chip_gen: v7x
topology: tpu7x:2x2x1
jax: 0.10.0
libtpu: 0.0.40
codegen_flags: <defaults>
</compile_context>

<pallas_src>
import math
import numpy as np
import jax
import jax.numpy as jnp
from jax import lax
from jax.experimental import pallas as pl
from jax.experimental.pallas import tpu as pltpu


# ---------------------------------------------------------------------------
# Filter construction (mirrors BlurPool.__init__)
# ---------------------------------------------------------------------------
def get_rect(filt_size):
    table = {
        1: [1.0],
        2: [1.0, 1.0],
        3: [1.0, 2.0, 1.0],
        4: [1.0, 3.0, 3.0, 1.0],
        5: [1.0, 4.0, 6.0, 4.0, 1.0],
        6: [1.0, 5.0, 10.0, 10.0, 5.0, 1.0],
        7: [1.0, 6.0, 15.0, 20.0, 15.0, 6.0, 1.0],
    }
    return np.asarray(table[filt_size], dtype=np.float32)


def make_downsample_matrix(out_len, padded_len, taps, stride):
    """A[i, stride*i + k] = taps[k]  (taps already normalized)."""
    A = np.zeros((out_len, padded_len), dtype=np.float32)
    fs = taps.shape[0]
    for i in range(out_len):
        A[i, stride * i:stride * i + fs] = taps
    return A


# ---------------------------------------------------------------------------
# Pallas kernel: B images per grid step, separable blur via two matmuls.
#   tmp = reshape(x, (B*H, W)) @ A_w^T      (merged GEMM, M = B*H)
#   out = A_h @ tmp[b]  for each b          (batched matmul on halved data)
# ---------------------------------------------------------------------------
def _blur_kernel(ah_ref, awt_ref, x_ref, o_ref):
    B, H, W = x_ref.shape
    Ho = ah_ref.shape[0]
    Wo = awt_ref.shape[1]

    # W-direction pass as one big GEMM.  (Leading-dim merge is layout-free
    # when H is a multiple of 8; otherwise Mosaic inserts a relayout.)
    x2d = x_ref[...].reshape(B * H, W)                           # (B*H, W)
    tmp = jnp.dot(x2d, awt_ref[...],
                  preferred_element_type=jnp.float32)            # (B*H, Wo)
    tmp = tmp.reshape(B, H, Wo)                                  # (B, H, Wo)

    # H-direction pass as a batched matmul (A_h shared across the batch).
    a_h = jnp.broadcast_to(ah_ref[...], (B, Ho, H))              # (B, Ho, H)
    out = lax.dot_general(
        a_h, tmp,
        dimension_numbers=(((2,), (1,)), ((0,), (0,))),
        preferred_element_type=jnp.float32)                      # (B, Ho, Wo)

    o_ref[...] = out.astype(o_ref.dtype)


# ---------------------------------------------------------------------------
# Wrapper
# ---------------------------------------------------------------------------
def blurpool(x, channels, pad_type="zero", filt_size=4, stride=2, pad_off=0):
    """x: (N, C, H, W) float32 -> (N, C, Ho, Wo), BlurPool forward (zero pad)."""
    # TODO(synk): pad_type 'reflect'/'replicate'/'circular' and scale_l2 branch
    # of Filter are not implemented (defaults used by BlurPool are covered).
    assert pad_type == "zero", "only zero padding implemented"
    N, C, H, W = x.shape
    assert C == channels

    if filt_size == 1:
        # Plain strided slice (with optional extra zero padding), no kernel.
        if pad_off == 0:
            return x[:, :, ::stride, ::stride]
        xp = jnp.pad(x, ((0, 0), (0, 0), (pad_off, pad_off), (pad_off, pad_off)))
        return xp[:, :, ::stride, ::stride]

    pad_l = int(1.0 * (filt_size - 1) / 2) + pad_off      # == pad_t
    pad_r = int(math.ceil(1.0 * (filt_size - 1) / 2)) + pad_off  # == pad_b

    Hp = H + pad_l + pad_r
    Wp = W + pad_l + pad_r
    Ho = (Hp - filt_size) // stride + 1
    Wo = (Wp - filt_size) // stride + 1

    # Downsample matrices with the zero-padding folded in: columns that hit
    # pad rows/cols multiply zeros, so they are dropped exactly.
    a = get_rect(filt_size)
    a = a / a.sum()
    A_h_full = make_downsample_matrix(Ho, Hp, a, stride)            # (Ho, Hp)
    A_w_full = make_downsample_matrix(Wo, Wp, a, stride)            # (Wo, Wp)
    A_h = jnp.asarray(A_h_full[:, pad_l:pad_l + H])                 # (Ho, H)
    A_wT = jnp.asarray(A_w_full[:, pad_l:pad_l + W].T)              # (W, Wo)

    NC = N * C
    x_flat = x.reshape(NC, H, W)

    # --- choose per-grid-step batch B -------------------------------------
    # Target a few MiB per (double-buffered) block so the pipeline runs near
    # the HBM roofline while staying well inside v7x's 64 MiB VMEM; keep the
    # grid length >= 2 so both v7x TensorCores get work.
    per_img_bytes = 4 * (H * W + H * Wo + Ho * H + 2 * Ho * Wo)
    target_blk_bytes = 4 * 1024 * 1024
    B = max(1, min(NC, target_blk_bytes // per_img_bytes))
    if NC >= 2:
        B = max(1, min(B, (NC + 1) // 2))
    G = -(-NC // B)            # grid length
    NCp = G * B
    if NCp != NC:              # pad with zero images; their outputs are dropped
        x_flat = jnp.concatenate(
            [x_flat, jnp.zeros((NCp - NC, H, W), x.dtype)], axis=0)

    # Memory-bound cost hint for XLA scheduling.
    flops = 2 * NC * (H * W * Wo + Ho * H * Wo)
    bytes_accessed = 4 * (NC * H * W + NC * Ho * Wo + Ho * H + W * Wo)
    cost = pl.CostEstimate(flops=flops, transcendentals=0,
                           bytes_accessed=bytes_accessed)

    blk_bytes = 4 * B * (H * W + Ho * Wo)
    vmem_limit = int(min(64 * 1024 * 1024, max(32 * 1024 * 1024, 4 * blk_bytes)))

    out_flat = pl.pallas_call(
        _blur_kernel,
        out_shape=jax.ShapeDtypeStruct((NCp, Ho, Wo), x.dtype),
        grid=(G,),
        in_specs=[
            pl.BlockSpec((Ho, H), lambda i: (0, 0)),       # A_h   (shared)
            pl.BlockSpec((W, Wo), lambda i: (0, 0)),       # A_w^T (shared)
            pl.BlockSpec((B, H, W), lambda i: (i, 0, 0)),  # B un-padded images
        ],
        out_specs=pl.BlockSpec((B, Ho, Wo), lambda i: (i, 0, 0)),
        compiler_params=pltpu.CompilerParams(
            dimension_semantics=("parallel",),
            vmem_limit_bytes=vmem_limit),
        cost_estimate=cost,
    )(A_h, A_wT, x_flat)

    return out_flat[:NC].reshape(N, C, Ho, Wo)


# ---------------------------------------------------------------------------
# Reference (pure JAX) for verification
# ---------------------------------------------------------------------------
def blurpool_ref(x, channels, filt_size=4, stride=2, pad_off=0):
    N, C, H, W = x.shape
    pad_l = int(1.0 * (filt_size - 1) / 2) + pad_off
    pad_r = int(math.ceil(1.0 * (filt_size - 1) / 2)) + pad_off
    xp = jnp.pad(x, ((0, 0), (0, 0), (pad_l, pad_r), (pad_l, pad_r)))
    a = get_rect(filt_size)
    filt2d = np.outer(a, a)
    filt2d = filt2d / filt2d.sum()
    w = jnp.asarray(filt2d)[None, None].repeat(C, axis=0)   # (C,1,fs,fs)
    out = lax.conv_general_dilated(
        xp, w, window_strides=(1, 1), padding="VALID",
        dimension_numbers=("NCHW", "OIHW", "NCHW"),
        feature_group_count=C)
    return out[:, :, ::stride, ::stride]


if __name__ == "__main__":
    key = jax.random.PRNGKey(0)
    N, C, H, W = 2, 4, 16, 16
    x = jax.random.normal(key, (N, C, H, W), dtype=jnp.float32)

    out = blurpool(x, channels=C)
    out = jax.block_until_ready(out)

    ref = blurpool_ref(x, channels=C)
    assert out.shape == ref.shape == (N, C, 8, 8), (out.shape, ref.shape)
    np.testing.assert_allclose(np.asarray(out), np.asarray(ref),
                               rtol=1e-5, atol=1e-5)
    print("KERNEL_OK")
</pallas_src>

<mosaic_0001>
module attributes {stable_mosaic.version = 11 : i64} {
  func.func @_blur_kernel(%arg0: i32, %arg1: memref<8x16xf32, #tpu.memory_space<vmem>>, %arg2: memref<16x8xf32, #tpu.memory_space<vmem>>, %arg3: memref<4x16x16xf32, #tpu.memory_space<vmem>>, %arg4: memref<4x8x8xf32, #tpu.memory_space<vmem>>) attributes {dimension_semantics = [#tpu.dimension_semantics<parallel>], iteration_bounds = array<i64: 2>, scalar_prefetch = 0 : i64, scratch_operands = 0 : i64, tpu.core_type = #tpu.core_type<tc>, window_params = [{pipeline_mode = #tpu.pipeline_mode<synchronous>, transform_indices = @transform_0, window_bounds = array<i64: 8, 16>}, {pipeline_mode = #tpu.pipeline_mode<synchronous>, transform_indices = @transform_1, window_bounds = array<i64: 16, 8>}, {transform_indices = @transform_2, window_bounds = array<i64: 4, 16, 16>}, {transform_indices = @transform_3, window_bounds = array<i64: 4, 8, 8>}]} {
    %c0 = arith.constant 0 : index
    %c0_0 = arith.constant 0 : index
    %c0_1 = arith.constant 0 : index
    %0 = vector.load %arg3[%c0, %c0_0, %c0_1] : memref<4x16x16xf32, #tpu.memory_space<vmem>>, vector<4x16x16xf32>
    %1 = vector.shape_cast %0 : vector<4x16x16xf32> to vector<64x16xf32>
    %c0_2 = arith.constant 0 : index
    %c0_3 = arith.constant 0 : index
    %2 = vector.load %arg2[%c0_2, %c0_3] : memref<16x8xf32, #tpu.memory_space<vmem>>, vector<16x8xf32>
    %cst = arith.constant dense<0.000000e+00> : vector<64x8xf32>
    %3 = tpu.matmul %1, %2, %cst {dimension_numbers = #tpu.dot_dimension_numbers<[1], [0], [0], [1], [0, 0, 1, 1], [], []>} : vector<64x16xf32>, vector<16x8xf32>, vector<64x8xf32> -> vector<64x8xf32>
    %4 = vector.shape_cast %3 : vector<64x8xf32> to vector<4x16x8xf32>
    %c0_4 = arith.constant 0 : index
    %c0_5 = arith.constant 0 : index
    %5 = vector.load %arg1[%c0_4, %c0_5] : memref<8x16xf32, #tpu.memory_space<vmem>>, vector<8x16xf32>
    %6 = vector.shape_cast %5 : vector<8x16xf32> to vector<1x8x16xf32>
    %7 = vector.broadcast %6 : vector<1x8x16xf32> to vector<4x8x16xf32>
    %cst_6 = arith.constant dense<0.000000e+00> : vector<4x8x8xf32>
    %8 = tpu.matmul %7, %4, %cst_6 {dimension_numbers = #tpu.dot_dimension_numbers<[2], [1], [1], [2], [0, 0, 0, 1, 1, 2], [0], [0]>} : vector<4x8x16xf32>, vector<4x16x8xf32>, vector<4x8x8xf32> -> vector<4x8x8xf32>
    %c0_7 = arith.constant 0 : index
    %c0_8 = arith.constant 0 : index
    %c0_9 = arith.constant 0 : index
    %9 = vector.load %arg4[%c0_7, %c0_8, %c0_9] : memref<4x8x8xf32, #tpu.memory_space<vmem>>, vector<4x8x8xf32>
    tpu.vector_store %arg4[%c0_7, %c0_8, %c0_9], %8 {strides = array<i32>} : memref<4x8x8xf32, #tpu.memory_space<vmem>>, vector<4x8x8xf32>,
    return
  }
  func.func @transform_0(%arg0: i32) -> (i32, i32) {
    %c0_i32 = arith.constant 0 : i32
    %c0_i32_0 = arith.constant 0 : i32
    %c0_i32_1 = arith.constant 0 : i32
    return %c0_i32, %c0_i32_0 : i32, i32
  }
  func.func @transform_1(%arg0: i32) -> (i32, i32) {
    %c0_i32 = arith.constant 0 : i32
    %c0_i32_0 = arith.constant 0 : i32
    %c0_i32_1 = arith.constant 0 : i32
    return %c0_i32, %c0_i32_0 : i32, i32
  }
  func.func @transform_2(%arg0: i32) -> (i32, i32, i32) {
    %c0_i32 = arith.constant 0 : i32
    %c0_i32_0 = arith.constant 0 : i32
    %c0_i32_1 = arith.constant 0 : i32
    return %arg0, %c0_i32, %c0_i32_0 : i32, i32, i32
  }
  func.func @transform_3(%arg0: i32) -> (i32, i32, i32) {
    %c0_i32 = arith.constant 0 : i32
    %c0_i32_0 = arith.constant 0 : i32
    %c0_i32_1 = arith.constant 0 : i32
    return %arg0, %c0_i32, %c0_i32_0 : i32, i32, i32
  }
}

</mosaic_0001>

<llo_original>
// kernel: tpu_custom_call.1
$region0: #{tpu_custom_call.1}
  #allocation0 [shape = 'u32[]', space=smem, size = 0x4, offset = 0x4, fixed_abs, tag = 'smem constant byte address 0x4 - core index']
  #allocation1 [shape = 'u32[144,128]{1,0:T(1,128)}', space=vmem, size = 0x12000, scoped, tag = 'internal scratch']
  %s0 = inlined_call_operand.vmem [shape: f32[8,16], index: 0, kind: input, shape index: {}]
  %s1 = inlined_call_operand.vmem [shape: f32[16,8], index: 1, kind: input, shape index: {}]
  %s2 = inlined_call_operand.hbm [shape: f32[8,16,16], index: 2, kind: input, shape index: {}]
  %s3 = inlined_call_operand.hbm [shape: f32[8,8,8], index: 3, kind: output, shape index: {}]
  %s4 = sld [smem:[#allocation0]]
  $region49: #{tpu_custom_call.1} parent=0
    _
  %s6 = ssub.s32 1, %s4
  %s7 = scalar_select 0, %s6, %s4
  $region1: #{tpu_custom_call.1} parent=0
    #allocation2 [shape = 'u8[65536]{0}', space=vmem, size = 0x10000, scoped, tag = 'input window, operand 2']
    #allocation3 [shape = 's32[2]{0}', space=sflag, size = 0x8, scoped, tag = 'scoped memory for tpu_custom_call.1']
    #allocation4 [shape = 's32[2]{0}', space=sflag, size = 0x8, scoped, tag = 'scoped memory for tpu_custom_call.1']
    #allocation5 [shape = 'u8[32768]{0}', space=vmem, size = 0x8000, scoped, tag = 'output window, operand 0']
    %8 = vsyncpa [#allocation3], 0
    %s9 = scalar_lea.sflag [#allocation3], 1
    %10 = vsyncpa %s9, 0
    %11 = vsyncpa [#allocation4], 0
    %s12 = scalar_lea.sflag [#allocation4], 1
    %13 = vsyncpa %s12, 0
    loop: start=0, step=1, limit=4
    $region2: #{tpu_custom_call.1} parent=1 // loop_pre_header
      _
    $region3: #{tpu_custom_call.1} parent=1 // loop_header
      %s15 = sphi 0, %s19
      %p16 = scmp.ge.s32.totalorder %s15, 4
      %s23 = sphi 0, %s23
      %s25 = sphi 0, %s23
      %s26 = sphi 0, %s25
      %s40 = sphi 0, %s26
      %s44 = sphi 0, %s44
      %s46 = sphi 0, %s44
      %s47 = sphi 0, %s46
      %s61 = sphi 0, %s47
      %s67 = sphi 0, %s69
      %s70 = sphi 0, %s67
      %s71 = sphi 0, %s70
      %s87 = sphi 0, %s71
      %s93 = sphi 0, %s95
      %s96 = sphi 0, %s93
      %s97 = sphi 0, %s96
      %s113 = sphi 0, %s97
    $region4: #{tpu_custom_call.1} parent=1 // loop_header_branch
      %18 = sbr.rel (%p16) target = $region8
    $region5: #{tpu_custom_call.1} parent=1 // loop_body
      %s20 = ssub.s32 %s15, 1
      %s21 = ssub.s32 %s15, 2
      %s22 = sadd.s32 %s15, 1
      %s24 = sadd.s32 %s23, 1
      %p27 = scmp.eq.s32.totalorder %s15, 1
      %p28 = scmp.ne.s32.totalorder %s23, %s25
      %p29 = scmp.eq.s32.totalorder %s15, 0
      %p30 = por %p28, %p29
      %p31 = scmp.ne.s32.totalorder %s23, %s25
      %p32 = scmp.eq.s32.totalorder %s20, 1
      %p33 = por %p31, %p32
      %p34 = scmp.ne.s32.totalorder %s25, %s26
      %p35 = scmp.eq.s32.totalorder %s20, 0
      %p36 = por %p34, %p35
      %p37 = scmp.ne.s32.totalorder %s25, %s26
      %p38 = scmp.eq.s32.totalorder %s21, 1
      %p39 = por %p37, %p38
      %p41 = scmp.ne.s32.totalorder %s26, %s40
      %p42 = scmp.eq.s32.totalorder %s21, 0
      %p43 = por %p41, %p42
      %s45 = sadd.s32 %s44, 1
      %p48 = scmp.eq.s32.totalorder %s15, 1
      %p49 = scmp.ne.s32.totalorder %s44, %s46
      %p50 = scmp.eq.s32.totalorder %s15, 0
      %p51 = por %p49, %p50
      %p52 = scmp.ne.s32.totalorder %s44, %s46
      %p53 = scmp.eq.s32.totalorder %s20, 1
      %p54 = por %p52, %p53
      %p55 = scmp.ne.s32.totalorder %s46, %s47
      %p56 = scmp.eq.s32.totalorder %s20, 0
      %p57 = por %p55, %p56
      %p58 = scmp.ne.s32.totalorder %s46, %s47
      %p59 = scmp.eq.s32.totalorder %s21, 1
      %p60 = por %p58, %p59
      %p62 = scmp.ne.s32.totalorder %s47, %s61
      %p63 = scmp.eq.s32.totalorder %s21, 0
      %p64 = por %p62, %p63
      %s65 = ssub.s32 %s15, %s22
      %p66 = scmp.eq.s32.totalorder %s65, 0
      %s68 = sadd.s32 %s67, 1
      %s69 = scalar_select %p66, %s67, %s68
      %p72 = pneg %p66
      %p73 = scmp.eq.s32.totalorder %s15, 1
      %p74 = por %p72, %p73
      %p75 = scmp.ne.s32.totalorder %s67, %s70
      %p76 = scmp.eq.s32.totalorder %s15, 0
      %p77 = por %p75, %p76
      %p78 = scmp.ne.s32.totalorder %s67, %s70
      %p79 = scmp.eq.s32.totalorder %s20, 1
      %p80 = por %p78, %p79
      %p81 = scmp.ne.s32.totalorder %s70, %s71
      %p82 = scmp.eq.s32.totalorder %s20, 0
      %p83 = por %p81, %p82
      %p84 = scmp.ne.s32.totalorder %s70, %s71
      %p85 = scmp.eq.s32.totalorder %s21, 1
      %p86 = por %p84, %p85
      %p88 = scmp.ne.s32.totalorder %s71, %s87
      %p89 = scmp.eq.s32.totalorder %s21, 0
      %p90 = por %p88, %p89
      %s91 = ssub.s32 %s15, %s22
      %p92 = scmp.eq.s32.totalorder %s91, 0
      %s94 = sadd.s32 %s93, 1
      %s95 = scalar_select %p92, %s93, %s94
      %p98 = pneg %p92
      %p99 = scmp.eq.s32.totalorder %s15, 1
      %p100 = por %p98, %p99
      %p101 = scmp.ne.s32.totalorder %s93, %s96
      %p102 = scmp.eq.s32.totalorder %s15, 0
      %p103 = por %p101, %p102
      %p104 = scmp.ne.s32.totalorder %s93, %s96
      %p105 = scmp.eq.s32.totalorder %s20, 1
      %p106 = por %p104, %p105
      %p107 = scmp.ne.s32.totalorder %s96, %s97
      %p108 = scmp.eq.s32.totalorder %s20, 0
      %p109 = por %p107, %p108
      %p110 = scmp.ne.s32.totalorder %s96, %s97
      %p111 = scmp.eq.s32.totalorder %s21, 1
      %p112 = por %p110, %p111
      %p114 = scmp.ne.s32.totalorder %s97, %s113
      %p115 = scmp.eq.s32.totalorder %s21, 0
      %p116 = por %p114, %p115
      %p117 = scmp.le.s32.totalorder 1, %s15
      %p118 = scmp.lt.s32.totalorder %s15, 3
      %p119 = pnand %p117, %p118
      %p120 = pneg %p119
      // Predicated region
      $region9: #{tpu_custom_call.1} parent=5 // pred_check
        _
      $region10: #{tpu_custom_call.1} parent=5 // pred_check_branch
        %122 = sbr.rel (%p119) target = $region12
      $region11: #{tpu_custom_call.1} parent=5 // pred_region
        %s123 = ssub.s32 %s15, 1
        // Predicated region
        $region13: #{tpu_custom_call.1} parent=11 // pred_check
          %p124 = pneg %p36
        $region14: #{tpu_custom_call.1} parent=11 // pred_check_branch
          %126 = sbr.rel (%p124) target = $region16
        $region15: #{tpu_custom_call.1} parent=11 // pred_region
          _
        $region16: #{tpu_custom_call.1} parent=11 // pred_fallthru
          _
        // Predicated region
        $region17: #{tpu_custom_call.1} parent=11 // pred_check
          %p127 = pneg %p57
        $region18: #{tpu_custom_call.1} parent=11 // pred_check_branch
          %129 = sbr.rel (%p127) target = $region20
        $region19: #{tpu_custom_call.1} parent=11 // pred_region
          _
        $region20: #{tpu_custom_call.1} parent=11 // pred_fallthru
          _
      $region12: #{tpu_custom_call.1} parent=5 // pred_fallthru
        _
      %p130 = scmp.lt.s32.totalorder %s15, 2
      // Predicated region
      $region21: #{tpu_custom_call.1} parent=5 // pred_check
        %p131 = pneg %p130
      $region22: #{tpu_custom_call.1} parent=5 // pred_check_branch
        %133 = sbr.rel (%p131) target = $region24
      $region23: #{tpu_custom_call.1} parent=5 // pred_region
        // Predicated region
        $region25: #{tpu_custom_call.1} parent=23 // pred_check
          %p134 = pneg %p77
        $region26: #{tpu_custom_call.1} parent=23 // pred_check_branch
          %136 = sbr.rel (%p134) target = $region28
        $region27: #{tpu_custom_call.1} parent=23 // pred_region
          %s137 = sand.u32 %s67, 1
          %s138 = scalar_lea.sflag [#allocation3], %s137
          %s139 = sand.u32 %s67, 1
          %s140 = smul.addr %s139, 64
          %s141 = scalar_lea.vmem [#allocation2], %s140
          %s142 = smul.u32 4, %s15
          %s144 = ssub.s32 1024, 1024
          %145 = vsyncadd %s138, %s144
          %s146 = smul.addr %s142, 2
          %s147 = smul.addr %s146, 128
          %s148 = scalar_lea.hbm %s2, %s147
          %s149 = sshll.u32 %s141, 4
          %s150 = int_to_ptr.vmem [resolvable:$true] %s149
          %155 = dma.hbm_to_vmem [thread:$0]  %s148, 1024, %s150, %s138, 128, 128, 8
        $region28: #{tpu_custom_call.1} parent=23 // pred_fallthru
          _
      $region24: #{tpu_custom_call.1} parent=5 // pred_fallthru
        _
      %p156 = scmp.le.s32.totalorder 1, %s15
      %p157 = scmp.lt.s32.totalorder %s15, 3
      %p158 = pnand %p156, %p157
      %p159 = pneg %p158
      // Predicated region
      $region29: #{tpu_custom_call.1} parent=5 // pred_check
        _
      $region30: #{tpu_custom_call.1} parent=5 // pred_check_branch
        %161 = sbr.rel (%p158) target = $region32
      $region31: #{tpu_custom_call.1} parent=5 // pred_region
        %s162 = ssub.s32 %s15, 1
        %s163 = sand.u32 %s70, 1
        %s164 = scalar_lea.sflag [#allocation3], %s163
        %s165 = sand.u32 %s70, 1
        %s166 = smul.addr %s165, 64
        %s167 = scalar_lea.vmem [#allocation2], %s166
        // Predicated region
        $region33: #{tpu_custom_call.1} parent=31 // pred_check
          %p168 = pneg %p83
        $region34: #{tpu_custom_call.1} parent=31 // pred_check_branch
          %170 = sbr.rel (%p168) target = $region36
        $region35: #{tpu_custom_call.1} parent=31 // pred_region
          %171 = dma.done %s164, 1024
        $region36: #{tpu_custom_call.1} parent=31 // pred_fallthru
          _
        %p172 = pneg %p36
        %p173 = pneg %p33
        %p174 = pneg %p57
        %p175 = pneg %p54
        %s176 = sand.u32 %s70, 1
        %s177 = scalar_lea.sflag [#allocation3], %s176
        %s178 = sand.u32 %s70, 1
        %s179 = smul.addr %s178, 64
        %s180 = scalar_lea.vmem [#allocation2], %s179
        %p181 = pneg %p83
        %p182 = pneg %p80
        %p183 = pneg %p109
        %p184 = pneg %p106
        %s185 = sand.u32 %s96, 1
        %s186 = scalar_lea.sflag [#allocation4], %s185
        %s187 = sand.u32 %s96, 1
        %s188 = smul.addr %s187, 32
        %s189 = scalar_lea.vmem [#allocation5], %s188
        %s190 = smul.u32 4, %s20
        %s191 = smul.u32 4, %s20
        %v192 = vld [vmem:[%s167] sm:$0xff]
        %v193 = vld [vmem:[%s167 + $0x8] sm:$0xff]
        %v194 = vld [vmem:[%s167 + $0x10] sm:$0xff]
        %v195 = vld [vmem:[%s167 + $0x18] sm:$0xff]
        %v196 = vld [vmem:[%s167 + $0x20] sm:$0xff]
        %v197 = vld [vmem:[%s167 + $0x28] sm:$0xff]
        %v198 = vld [vmem:[%s167 + $0x30] sm:$0xff]
        %v199 = vld [vmem:[%s167 + $0x38] sm:$0xff]
        %v200 = vld [vmem:[%s1] sm:$0xff]
        %v201 = vld [vmem:[%s1 + $0x8] sm:$0xff]
        %vm202 = vcmask 130048
        %v204 = vsel %vm202, %v192, 0
        %v207 = vsel %vm202, %v193, 0
        %v210 = vsel %vm202, %v194, 0
        %v213 = vsel %vm202, %v195, 0
        %v216 = vsel %vm202, %v196, 0
        %v219 = vsel %vm202, %v197, 0
        %v222 = vsel %vm202, %v198, 0
        %v225 = vsel %vm202, %v199, 0
        %227 = vmatprep.subr.mxu0 0.0
        %228 = vmatpush1.msra.mxu0 %v200
        %229 = vmatprep.subr.mxu0 0.0
        %230 = vmatpush1.msra.mxu0 %v201
        %231 = vmatprep.subr.mxu0 0.0
        %232 = vmatpush1.msra.mxu0 0.0
        %233 = vmatprep.subr.mxu0 0.0
        %234 = vmatpush1.msra.mxu0 0.0
        %235 = vmatprep.subr.mxu0 0.0
        %236 = vmatpush1.msra.mxu0 0.0
        %237 = vmatprep.subr.mxu0 0.0
        %238 = vmatpush1.msra.mxu0 0.0
        %239 = vmatprep.subr.mxu0 0.0
        %240 = vmatpush1.msra.mxu0 0.0
        %241 = vmatprep.subr.mxu0 0.0
        %242 = vmatpush1.msra.mxu0 0.0
        %243 = vmatprep.subr.mxu0 0.0
        %244 = vmatpush1.msra.mxu0 0.0
        %245 = vmatprep.subr.mxu0 0.0
        %246 = vmatpush1.msra.mxu0 0.0
        %247 = vmatprep.subr.mxu0 0.0
        %248 = vmatpush1.msra.mxu0 0.0
        %249 = vmatprep.subr.mxu0 0.0
        %250 = vmatpush1.msra.mxu0 0.0
        %251 = vmatprep.subr.mxu0 0.0
        %252 = vmatpush1.msra.mxu0 0.0
        %253 = vmatprep.subr.mxu0 0.0
        %254 = vmatpush1.msra.mxu0 0.0
        %255 = vmatprep.subr.mxu0 0.0
        %256 = vmatpush1.msra.mxu0 0.0
        %257 = vmatprep.subr.mxu0 0.0
        %258 = vmatpush1.msra.mxu0 0.0
        %259 = vmatprep.subr.mxu0 0.0
        %260 = vmatpush1.msra.mxu0 0.0
        %261 = vmatprep.subr.mxu0 0.0
        %262 = vmatpush1.msra.mxu0 0.0
        %263 = vmatprep.subr.mxu0 0.0
        %264 = vmatpush1.msra.mxu0 0.0
        %265 = vmatprep.subr.mxu0 0.0
        %266 = vmatpush1.msra.mxu0 0.0
        %267 = vmatprep.subr.mxu0 0.0
        %268 = vmatpush1.msra.mxu0 0.0
        %269 = vmatprep.subr.mxu0 0.0
        %270 = vmatpush1.msra.mxu0 0.0
        %271 = vmatprep.subr.mxu0 0.0
        %272 = vmatpush1.msra.mxu0 0.0
        %273 = vmatprep.subr.mxu0 0.0
        %274 = vmatpush1.msra.mxu0 0.0
        %275 = vmatprep.subr.mxu0 0.0
        %276 = vmatpush1.msra.mxu0 0.0
        %277 = vmatprep.subr.mxu0 0.0
        %278 = vmatpush1.msra.mxu0 0.0
        %279 = vmatprep.subr.mxu0 0.0
        %280 = vmatpush1.msra.mxu0 0.0
        %281 = vmatprep.subr.mxu0 0.0
        %282 = vmatpush1.msra.mxu0 0.0
        %283 = vmatprep.subr.mxu0 0.0
        %284 = vmatpush1.msra.mxu0 0.0
        %285 = vmatprep.subr.mxu0 0.0
        %286 = vmatpush1.msra.mxu0 0.0
        %287 = vmatprep.subr.mxu0 0.0
        %288 = vmatpush1.msra.mxu0 0.0
        %289 = vmatprep.subr.mxu0 0.0
        %290 = vmatpush1.msra.mxu0 0.0
        %291 = vmatprep.mubr.f32.mxu0 0.0
        %292 = vmatmul.mubr.f32.gmra.mrb[0].mxu0 %v204
        %v293 = vpop.f32.mrb[0].mxu0
        %v294 = vadd.f32 0.0, %v293
        %v295 = vpop.f32.mrb[0].mxu0
        %296 = vmatprep.mubr.f32.mxu0 0.0
        %297 = vmatmul.mubr.f32.gmra.mrb[0].mxu0 %v207
        %v298 = vpop.f32.mrb[0].mxu0
        %v299 = vadd.f32 0.0, %v298
        %v300 = vpop.f32.mrb[0].mxu0
        %301 = vmatprep.mubr.f32.mxu0 0.0
        %302 = vmatmul.mubr.f32.gmra.mrb[0].mxu0 %v210
        %v303 = vpop.f32.mrb[0].mxu0
        %v304 = vadd.f32 0.0, %v303
        %v305 = vpop.f32.mrb[0].mxu0
        %306 = vmatprep.mubr.f32.mxu0 0.0
        %307 = vmatmul.mubr.f32.gmra.mrb[0].mxu0 %v213
        %v308 = vpop.f32.mrb[0].mxu0
        %v309 = vadd.f32 0.0, %v308
        %v310 = vpop.f32.mrb[0].mxu0
        %311 = vmatprep.mubr.f32.mxu0 0.0
        %312 = vmatmul.mubr.f32.gmra.mrb[0].mxu0 %v216
        %v313 = vpop.f32.mrb[0].mxu0
        %v314 = vadd.f32 0.0, %v313
        %v315 = vpop.f32.mrb[0].mxu0
        %316 = vmatprep.mubr.f32.mxu0 0.0
        %317 = vmatmul.mubr.f32.gmra.mrb[0].mxu0 %v219
        %v318 = vpop.f32.mrb[0].mxu0
        %v319 = vadd.f32 0.0, %v318
        %v320 = vpop.f32.mrb[0].mxu0
        %321 = vmatprep.mubr.f32.mxu0 0.0
        %322 = vmatmul.mubr.f32.gmra.mrb[0].mxu0 %v222
        %v323 = vpop.f32.mrb[0].mxu0
        %v324 = vadd.f32 0.0, %v323
        %v325 = vpop.f32.mrb[0].mxu0
        %326 = vmatprep.mubr.f32.mxu0 0.0
        %327 = vmatmul.mubr.f32.gmra.mrb[0].mxu0 %v225
        %v328 = vpop.f32.mrb[0].mxu0
        %v329 = vadd.f32 0.0, %v328
        %v330 = vpop.f32.mrb[0].mxu0
        %331 = vdwg.mxu0
        %v332 = vld [vmem:[%s0] sm:$0xff]
        %v334 = vsel %vm202, %v332, 0
        %336 = vmatprep.subr.mxu0 0.0
        %337 = vmatpush1.msra.mxu0 %v294
        %338 = vmatprep.subr.mxu0 0.0
        %339 = vmatpush1.msra.mxu0 %v299
        %340 = vmatprep.subr.mxu0 0.0
        %341 = vmatpush1.msra.mxu0 0.0
        %342 = vmatprep.subr.mxu0 0.0
        %343 = vmatpush1.msra.mxu0 0.0
        %344 = vmatprep.subr.mxu0 0.0
        %345 = vmatpush1.msra.mxu0 0.0
        %346 = vmatprep.subr.mxu0 0.0
        %347 = vmatpush1.msra.mxu0 0.0
        %348 = vmatprep.subr.mxu0 0.0
        %349 = vmatpush1.msra.mxu0 0.0
        %350 = vmatprep.subr.mxu0 0.0
        %351 = vmatpush1.msra.mxu0 0.0
        %352 = vmatprep.subr.mxu0 0.0
        %353 = vmatpush1.msra.mxu0 0.0
        %354 = vmatprep.subr.mxu0 0.0
        %355 = vmatpush1.msra.mxu0 0.0
        %356 = vmatprep.subr.mxu0 0.0
        %357 = vmatpush1.msra.mxu0 0.0
        %358 = vmatprep.subr.mxu0 0.0
        %359 = vmatpush1.msra.mxu0 0.0
        %360 = vmatprep.subr.mxu0 0.0
        %361 = vmatpush1.msra.mxu0 0.0
        %362 = vmatprep.subr.mxu0 0.0
        %363 = vmatpush1.msra.mxu0 0.0
        %364 = vmatprep.subr.mxu0 0.0
        %365 = vmatpush1.msra.mxu0 0.0
        %366 = vmatprep.subr.mxu0 0.0
        %367 = vmatpush1.msra.mxu0 0.0
        %368 = vmatprep.subr.mxu0 0.0
        %369 = vmatpush1.msra.mxu0 0.0
        %370 = vmatprep.subr.mxu0 0.0
        %371 = vmatpush1.msra.mxu0 0.0
        %372 = vmatprep.subr.mxu0 0.0
        %373 = vmatpush1.msra.mxu0 0.0
        %374 = vmatprep.subr.mxu0 0.0
        %375 = vmatpush1.msra.mxu0 0.0
        %376 = vmatprep.subr.mxu0 0.0
        %377 = vmatpush1.msra.mxu0 0.0
        %378 = vmatprep.subr.mxu0 0.0
        %379 = vmatpush1.msra.mxu0 0.0
        %380 = vmatprep.subr.mxu0 0.0
        %381 = vmatpush1.msra.mxu0 0.0
        %382 = vmatprep.subr.mxu0 0.0
        %383 = vmatpush1.msra.mxu0 0.0
        %384 = vmatprep.subr.mxu0 0.0
        %385 = vmatpush1.msra.mxu0 0.0
        %386 = vmatprep.subr.mxu0 0.0
        %387 = vmatpush1.msra.mxu0 0.0
        %388 = vmatprep.subr.mxu0 0.0
        %389 = vmatpush1.msra.mxu0 0.0
        %390 = vmatprep.subr.mxu0 0.0
        %391 = vmatpush1.msra.mxu0 0.0
        %392 = vmatprep.subr.mxu0 0.0
        %393 = vmatpush1.msra.mxu0 0.0
        %394 = vmatprep.subr.mxu0 0.0
        %395 = vmatpush1.msra.mxu0 0.0
        %396 = vmatprep.subr.mxu0 0.0
        %397 = vmatpush1.msra.mxu0 0.0
        %398 = vmatprep.subr.mxu0 0.0
        %399 = vmatpush1.msra.mxu0 0.0
        %400 = vmatprep.mubr.f32.mxu0 0.0
        %401 = vmatmul.mubr.f32.gmra.mrb[0].mxu0 %v334
        %v402 = vpop.f32.mrb[0].mxu0
        %v403 = vadd.f32 0.0, %v402
        %v404 = vpop.f32.mrb[0].mxu0
        %405 = vdwg.mxu0
        %406 = vmatprep.subr.mxu0 0.0
        %407 = vmatpush1.msra.mxu0 %v304
        %408 = vmatprep.subr.mxu0 0.0
        %409 = vmatpush1.msra.mxu0 %v309
        %410 = vmatprep.subr.mxu0 0.0
        %411 = vmatpush1.msra.mxu0 0.0
        %412 = vmatprep.subr.mxu0 0.0
        %413 = vmatpush1.msra.mxu0 0.0
        %414 = vmatprep.subr.mxu0 0.0
        %415 = vmatpush1.msra.mxu0 0.0
        %416 = vmatprep.subr.mxu0 0.0
        %417 = vmatpush1.msra.mxu0 0.0
        %418 = vmatprep.subr.mxu0 0.0
        %419 = vmatpush1.msra.mxu0 0.0
        %420 = vmatprep.subr.mxu0 0.0
        %421 = vmatpush1.msra.mxu0 0.0
        %422 = vmatprep.subr.mxu0 0.0
        %423 = vmatpush1.msra.mxu0 0.0
        %424 = vmatprep.subr.mxu0 0.0
        %425 = vmatpush1.msra.mxu0 0.0
        %426 = vmatprep.subr.mxu0 0.0
        %427 = vmatpush1.msra.mxu0 0.0
        %428 = vmatprep.subr.mxu0 0.0
        %429 = vmatpush1.msra.mxu0 0.0
        %430 = vmatprep.subr.mxu0 0.0
        %431 = vmatpush1.msra.mxu0 0.0
        %432 = vmatprep.subr.mxu0 0.0
        %433 = vmatpush1.msra.mxu0 0.0
        %434 = vmatprep.subr.mxu0 0.0
        %435 = vmatpush1.msra.mxu0 0.0
        %436 = vmatprep.subr.mxu0 0.0
        %437 = vmatpush1.msra.mxu0 0.0
        %438 = vmatprep.subr.mxu0 0.0
        %439 = vmatpush1.msra.mxu0 0.0
        %440 = vmatprep.subr.mxu0 0.0
        %441 = vmatpush1.msra.mxu0 0.0
        %442 = vmatprep.subr.mxu0 0.0
        %443 = vmatpush1.msra.mxu0 0.0
        %444 = vmatprep.subr.mxu0 0.0
        %445 = vmatpush1.msra.mxu0 0.0
        %446 = vmatprep.subr.mxu0 0.0
        %447 = vmatpush1.msra.mxu0 0.0
        %448 = vmatprep.subr.mxu0 0.0
        %449 = vmatpush1.msra.mxu0 0.0
        %450 = vmatprep.subr.mxu0 0.0
        %451 = vmatpush1.msra.mxu0 0.0
        %452 = vmatprep.subr.mxu0 0.0
        %453 = vmatpush1.msra.mxu0 0.0
        %454 = vmatprep.subr.mxu0 0.0
        %455 = vmatpush1.msra.mxu0 0.0
        %456 = vmatprep.subr.mxu0 0.0
        %457 = vmatpush1.msra.mxu0 0.0
        %458 = vmatprep.subr.mxu0 0.0
        %459 = vmatpush1.msra.mxu0 0.0
        %460 = vmatprep.subr.mxu0 0.0
        %461 = vmatpush1.msra.mxu0 0.0
        %462 = vmatprep.subr.mxu0 0.0
        %463 = vmatpush1.msra.mxu0 0.0
        %464 = vmatprep.subr.mxu0 0.0
        %465 = vmatpush1.msra.mxu0 0.0
        %466 = vmatprep.subr.mxu0 0.0
        %467 = vmatpush1.msra.mxu0 0.0
        %468 = vmatprep.subr.mxu0 0.0
        %469 = vmatpush1.msra.mxu0 0.0
        %470 = vmatprep.mubr.f32.mxu0 0.0
        %471 = vmatmul.mubr.f32.gmra.mrb[0].mxu0 %v334
        %v472 = vpop.f32.mrb[0].mxu0
        %v473 = vadd.f32 0.0, %v472
        %v474 = vpop.f32.mrb[0].mxu0
        %475 = vdwg.mxu0
        %476 = vmatprep.subr.mxu0 0.0
        %477 = vmatpush1.msra.mxu0 %v314
        %478 = vmatprep.subr.mxu0 0.0
        %479 = vmatpush1.msra.mxu0 %v319
        %480 = vmatprep.subr.mxu0 0.0
        %481 = vmatpush1.msra.mxu0 0.0
        %482 = vmatprep.subr.mxu0 0.0
        %483 = vmatpush1.msra.mxu0 0.0
        %484 = vmatprep.subr.mxu0 0.0
        %485 = vmatpush1.msra.mxu0 0.0
        %486 = vmatprep.subr.mxu0 0.0
        %487 = vmatpush1.msra.mxu0 0.0
        %488 = vmatprep.subr.mxu0 0.0
        %489 = vmatpush1.msra.mxu0 0.0
        %490 = vmatprep.subr.mxu0 0.0
        %491 = vmatpush1.msra.mxu0 0.0
        %492 = vmatprep.subr.mxu0 0.0
        %493 = vmatpush1.msra.mxu0 0.0
        %494 = vmatprep.subr.mxu0 0.0
        %495 = vmatpush1.msra.mxu0 0.0
        %496 = vmatprep.subr.mxu0 0.0
        %497 = vmatpush1.msra.mxu0 0.0
        %498 = vmatprep.subr.mxu0 0.0
        %499 = vmatpush1.msra.mxu0 0.0
        %500 = vmatprep.subr.mxu0 0.0
        %501 = vmatpush1.msra.mxu0 0.0
        %502 = vmatprep.subr.mxu0 0.0
        %503 = vmatpush1.msra.mxu0 0.0
        %504 = vmatprep.subr.mxu0 0.0
        %505 = vmatpush1.msra.mxu0 0.0
        %506 = vmatprep.subr.mxu0 0.0
        %507 = vmatpush1.msra.mxu0 0.0
        %508 = vmatprep.subr.mxu0 0.0
        %509 = vmatpush1.msra.mxu0 0.0
        %510 = vmatprep.subr.mxu0 0.0
        %511 = vmatpush1.msra.mxu0 0.0
        %512 = vmatprep.subr.mxu0 0.0
        %513 = vmatpush1.msra.mxu0 0.0
        %514 = vmatprep.subr.mxu0 0.0
        %515 = vmatpush1.msra.mxu0 0.0
        %516 = vmatprep.subr.mxu0 0.0
        %517 = vmatpush1.msra.mxu0 0.0
        %518 = vmatprep.subr.mxu0 0.0
        %519 = vmatpush1.msra.mxu0 0.0
        %520 = vmatprep.subr.mxu0 0.0
        %521 = vmatpush1.msra.mxu0 0.0
        %522 = vmatprep.subr.mxu0 0.0
        %523 = vmatpush1.msra.mxu0 0.0
        %524 = vmatprep.subr.mxu0 0.0
        %525 = vmatpush1.msra.mxu0 0.0
        %526 = vmatprep.subr.mxu0 0.0
        %527 = vmatpush1.msra.mxu0 0.0
        %528 = vmatprep.subr.mxu0 0.0
        %529 = vmatpush1.msra.mxu0 0.0
        %530 = vmatprep.subr.mxu0 0.0
        %531 = vmatpush1.msra.mxu0 0.0
        %532 = vmatprep.subr.mxu0 0.0
        %533 = vmatpush1.msra.mxu0 0.0
        %534 = vmatprep.subr.mxu0 0.0
        %535 = vmatpush1.msra.mxu0 0.0
        %536 = vmatprep.subr.mxu0 0.0
        %537 = vmatpush1.msra.mxu0 0.0
        %538 = vmatprep.subr.mxu0 0.0
        %539 = vmatpush1.msra.mxu0 0.0
        %540 = vmatprep.mubr.f32.mxu0 0.0
        %541 = vmatmul.mubr.f32.gmra.mrb[0].mxu0 %v334
        %v542 = vpop.f32.mrb[0].mxu0
        %v543 = vadd.f32 0.0, %v542
        %v544 = vpop.f32.mrb[0].mxu0
        %545 = vdwg.mxu0
        %546 = vmatprep.subr.mxu0 0.0
        %547 = vmatpush1.msra.mxu0 %v324
        %548 = vmatprep.subr.mxu0 0.0
        %549 = vmatpush1.msra.mxu0 %v329
        %550 = vmatprep.subr.mxu0 0.0
        %551 = vmatpush1.msra.mxu0 0.0
        %552 = vmatprep.subr.mxu0 0.0
        %553 = vmatpush1.msra.mxu0 0.0
        %554 = vmatprep.subr.mxu0 0.0
        %555 = vmatpush1.msra.mxu0 0.0
        %556 = vmatprep.subr.mxu0 0.0
        %557 = vmatpush1.msra.mxu0 0.0
        %558 = vmatprep.subr.mxu0 0.0
        %559 = vmatpush1.msra.mxu0 0.0
        %560 = vmatprep.subr.mxu0 0.0
        %561 = vmatpush1.msra.mxu0 0.0
        %562 = vmatprep.subr.mxu0 0.0
        %563 = vmatpush1.msra.mxu0 0.0
        %564 = vmatprep.subr.mxu0 0.0
        %565 = vmatpush1.msra.mxu0 0.0
        %566 = vmatprep.subr.mxu0 0.0
        %567 = vmatpush1.msra.mxu0 0.0
        %568 = vmatprep.subr.mxu0 0.0
        %569 = vmatpush1.msra.mxu0 0.0
        %570 = vmatprep.subr.mxu0 0.0
        %571 = vmatpush1.msra.mxu0 0.0
        %572 = vmatprep.subr.mxu0 0.0
        %573 = vmatpush1.msra.mxu0 0.0
        %574 = vmatprep.subr.mxu0 0.0
        %575 = vmatpush1.msra.mxu0 0.0
        %576 = vmatprep.subr.mxu0 0.0
        %577 = vmatpush1.msra.mxu0 0.0
        %578 = vmatprep.subr.mxu0 0.0
        %579 = vmatpush1.msra.mxu0 0.0
        %580 = vmatprep.subr.mxu0 0.0
        %581 = vmatpush1.msra.mxu0 0.0
        %582 = vmatprep.subr.mxu0 0.0
        %583 = vmatpush1.msra.mxu0 0.0
        %584 = vmatprep.subr.mxu0 0.0
        %585 = vmatpush1.msra.mxu0 0.0
        %586 = vmatprep.subr.mxu0 0.0
        %587 = vmatpush1.msra.mxu0 0.0
        %588 = vmatprep.subr.mxu0 0.0
        %589 = vmatpush1.msra.mxu0 0.0
        %590 = vmatprep.subr.mxu0 0.0
        %591 = vmatpush1.msra.mxu0 0.0
        %592 = vmatprep.subr.mxu0 0.0
        %593 = vmatpush1.msra.mxu0 0.0
        %594 = vmatprep.subr.mxu0 0.0
        %595 = vmatpush1.msra.mxu0 0.0
        %596 = vmatprep.subr.mxu0 0.0
        %597 = vmatpush1.msra.mxu0 0.0
        %598 = vmatprep.subr.mxu0 0.0
        %599 = vmatpush1.msra.mxu0 0.0
        %600 = vmatprep.subr.mxu0 0.0
        %601 = vmatpush1.msra.mxu0 0.0
        %602 = vmatprep.subr.mxu0 0.0
        %603 = vmatpush1.msra.mxu0 0.0
        %604 = vmatprep.subr.mxu0 0.0
        %605 = vmatpush1.msra.mxu0 0.0
        %606 = vmatprep.subr.mxu0 0.0
        %607 = vmatpush1.msra.mxu0 0.0
        %608 = vmatprep.subr.mxu0 0.0
        %609 = vmatpush1.msra.mxu0 0.0
        %610 = vmatprep.mubr.f32.mxu0 0.0
        %611 = vmatmul.mubr.f32.gmra.mrb[0].mxu0 %v334
        %v612 = vpop.f32.mrb[0].mxu0
        %v613 = vadd.f32 0.0, %v612
        %v614 = vpop.f32.mrb[0].mxu0
        %615 = vdwg.mxu0
        %vm616 = vcmask 64512
        %617 = vst.msk [vmem:[%s189] sm:$0xff] %vm616, %v403
        %618 = vst.msk [vmem:[%s189 + $0x8] sm:$0xff] %vm616, %v473
        %619 = vst.msk [vmem:[%s189 + $0x10] sm:$0xff] %vm616, %v543
        %620 = vst.msk [vmem:[%s189 + $0x18] sm:$0xff] %vm616, %v613
        %s621 = sand.u32 %s96, 1
        %s622 = scalar_lea.sflag [#allocation4], %s621
        %s623 = sand.u32 %s96, 1
        %s624 = smul.addr %s623, 32
        %s625 = scalar_lea.vmem [#allocation5], %s624
        // Predicated region
        $region37: #{tpu_custom_call.1} parent=31 // pred_check
          %p626 = pneg %p106
        $region38: #{tpu_custom_call.1} parent=31 // pred_check_branch
          %628 = sbr.rel (%p626) target = $region40
        $region39: #{tpu_custom_call.1} parent=31 // pred_region
          %s629 = smul.u32 4, %s20
          %s631 = ssub.s32 512, 512
          %632 = vsyncadd %s622, %s631
          %s633 = smul.addr %s629, 128
          %s634 = scalar_lea.hbm %s3, %s633
          %s635 = sshll.u32 %s625, 4
          %s636 = int_to_ptr.vmem [resolvable:$true] %s635
          %641 = dma.vmem_to_hbm [thread:$0]  %s636, 512, %s634, %s622, 128, 128, 8
        $region40: #{tpu_custom_call.1} parent=31 // pred_fallthru
          _
      $region32: #{tpu_custom_call.1} parent=5 // pred_fallthru
        _
      %p642 = scmp.le.s32.totalorder 2, %s15
      // Predicated region
      $region41: #{tpu_custom_call.1} parent=5 // pred_check
        %p643 = pneg %p642
      $region42: #{tpu_custom_call.1} parent=5 // pred_check_branch
        %645 = sbr.rel (%p643) target = $region44
      $region43: #{tpu_custom_call.1} parent=5 // pred_region
        %s646 = ssub.s32 %s15, 2
        // Predicated region
        $region45: #{tpu_custom_call.1} parent=43 // pred_check
          %p647 = pneg %p112
        $region46: #{tpu_custom_call.1} parent=43 // pred_check_branch
          %649 = sbr.rel (%p647) target = $region48
        $region47: #{tpu_custom_call.1} parent=43 // pred_region
          %s650 = sand.u32 %s97, 1
          %s651 = scalar_lea.sflag [#allocation4], %s650
          %s652 = sand.u32 %s97, 1
          %s653 = smul.addr %s652, 32
          %s654 = scalar_lea.vmem [#allocation5], %s653
          %655 = dma.done %s651, 512
        $region48: #{tpu_custom_call.1} parent=43 // pred_fallthru
          _
      $region44: #{tpu_custom_call.1} parent=5 // pred_fallthru
        _
    $region6: #{tpu_custom_call.1} parent=1 // loop_footer
      %s19 = sadd.s32 1, %s15
    $region7: #{tpu_custom_call.1} parent=1 // loop_footer_branch
      %14 = sbr.rel target = $region3
    $region8: #{tpu_custom_call.1} parent=1 // loop_exit
      _
    %656 = vsyncpa [#allocation3], 1
    %s657 = scalar_lea.sflag [#allocation3], 1
    %658 = vsyncpa %s657, 1
    %659 = vsyncpa [#allocation4], 1
    %s660 = scalar_lea.sflag [#allocation4], 1
    %661 = vsyncpa %s660, 1

</llo_original>
